<compile_context>
chip_gen: v7x
topology: tpu7x:2x2x1
jax: 0.10.0
libtpu: 0.0.40
codegen_flags: <defaults>
</compile_context>

<pallas_src>
import jax
import jax.numpy as jnp
from jax import lax
from jax.experimental import pallas as pl
from jax.experimental.pallas import tpu as pltpu

# ---------------- model hyper-parameters (small, deterministic) -------------
FILTER_NUM    = 8
FILTER_SIZES  = (3, 4, 5)
VOCAB_SIZE    = 50
EMBEDDING_DIM = 32
OUTPUT_DIM    = 4
PAD_IDX       = 0

BATCH   = 2
SEQ_LEN = 16

OUT_PAD = 128   # lane-dense padded logits width (sliced to OUTPUT_DIM in wrapper)


# ------------------------------- Pallas kernel ------------------------------
def textcnn_kernel(ids_ref,      # (B*L, 1) int32 token ids
                   emb_ref,      # (V, D)   f32 embedding table (pad row zeroed)
                   convw_ref,    # (kmax*D, 3*F) f32 fused conv weight, zero-padded per filter
                   convaux_ref,  # (2, 3*F) f32: row 0 = conv bias, row 1 = last valid pos (L - fs)
                   fc_ref,       # (3*F + 1, OUT_PAD) f32: rows 0..3F-1 fc weight, row 3F fc bias
                   out_ref):     # (B, OUT_PAD) f32 padded logits
    BL = ids_ref.shape[0]
    V, D = emb_ref.shape
    KMAX, NC = convw_ref.shape
    kmax = KMAX // D
    B = out_ref.shape[0]
    L = BL // B

    # ---- embedding lookup as a one-hot matmul (gather stays on the MXU, in-kernel)
    ids = ids_ref[...]                                               # (BL, 1) int32
    vocab_iota = lax.broadcasted_iota(jnp.int32, (BL, V), 1)
    onehot = (vocab_iota == ids).astype(jnp.float32)                 # (BL, V)
    emb = jnp.dot(onehot, emb_ref[...],
                  preferred_element_type=jnp.float32)                # (BL, D)
    # dropout is identity at inference.

    # ---- shared im2col slab: slab[m, k*D + d] = emb[m + k, d] (zero past the end)
    pad_rows = max(8, ((kmax - 1 + 7) // 8) * 8)
    emb_pad = jnp.concatenate([emb, jnp.zeros((pad_rows, D), jnp.float32)], axis=0)
    slab = jnp.concatenate([emb_pad[k:k + BL, :] for k in range(kmax)], axis=1)   # (BL, kmax*D)

    # ---- all three convolutions as ONE matmul against the block-packed weight, bias, ReLU
    conv = jnp.dot(slab, convw_ref[...],
                   preferred_element_type=jnp.float32)               # (BL, NC)
    conv = jnp.maximum(conv + convaux_ref[0:1, :], 0.0)

    # ---- mask window positions that run off the end of each sequence, max-pool over time
    conv3 = conv.reshape(B, L, NC)
    pos = lax.broadcasted_iota(jnp.int32, (B, L, NC), 1).astype(jnp.float32)
    valid = pos <= convaux_ref[1:2, :]                               # threshold = L - fs per column
    pooled = jnp.max(jnp.where(valid, conv3, 0.0), axis=1)           # (B, NC) == torch.cat(pooled, 1)

    # ---- classifier: one matmul into a lane-dense 128-wide output tile
    logits = jnp.dot(pooled, fc_ref[0:NC, :],
                     preferred_element_type=jnp.float32) + fc_ref[NC:NC + 1, :]
    out_ref[...] = logits.astype(out_ref.dtype)


# ------------------------- host-side parameter packing ----------------------
def pack_params(params, seq_len):
    """Pack PyTorch-layout params into the kernel's fused operands (host-side, once)."""
    D, F = EMBEDDING_DIM, FILTER_NUM
    kmax = max(FILTER_SIZES)
    NC = len(FILTER_SIZES) * F

    conv_w = jnp.zeros((kmax * D, NC), jnp.float32)
    conv_aux = jnp.zeros((2, NC), jnp.float32)
    for i, fs in enumerate(FILTER_SIZES):
        w = params['conv_w'][i].reshape(fs * D, F)                   # (fs, D, F) -> (fs*D, F)
        conv_w = conv_w.at[:fs * D, i * F:(i + 1) * F].set(w)
        conv_aux = conv_aux.at[0, i * F:(i + 1) * F].set(params['conv_b'][i].reshape(F))
        conv_aux = conv_aux.at[1, i * F:(i + 1) * F].set(float(seq_len - fs))

    fc = jnp.zeros((NC + 1, OUT_PAD), jnp.float32)
    fc = fc.at[:NC, :OUTPUT_DIM].set(params['fc_w'])
    fc = fc.at[NC, :OUTPUT_DIM].set(params['fc_b'].reshape(OUTPUT_DIM))

    return params['embedding'], conv_w, conv_aux, fc


@jax.jit
def textcnn_forward(text, emb_tbl, conv_w, conv_aux, fc):
    """text: (B, L) int32 token ids. Returns (B, OUTPUT_DIM) f32 logits."""
    B, L = text.shape
    ids = text.reshape(B * L, 1).astype(jnp.int32)
    vmem = pl.BlockSpec(memory_space=pltpu.MemorySpace.VMEM)
    out = pl.pallas_call(
        textcnn_kernel,
        out_shape=jax.ShapeDtypeStruct((B, OUT_PAD), jnp.float32),
        in_specs=[vmem] * 5,
        out_specs=vmem,
    )(ids, emb_tbl, conv_w, conv_aux, fc)
    return out[:, :OUTPUT_DIM]


# -------------------------- deterministic parameters ------------------------
def init_params(key):
    ks = jax.random.split(key, 3 + 2 * len(FILTER_SIZES))
    # embedding (vocab, D), padding row zeroed (matches nn.Embedding(padding_idx))
    emb_tbl = 0.1 * jax.random.normal(ks[0], (VOCAB_SIZE, EMBEDDING_DIM), jnp.float32)
    emb_tbl = emb_tbl.at[PAD_IDX].set(0.0)

    conv_w, conv_b = [], []
    for i, fs in enumerate(FILTER_SIZES):
        # PyTorch Conv2d weight OIHW = (F, 1, fs, D) -> kernel layout (fs, D, F)
        w_oihw = 0.1 * jax.random.normal(
            ks[1 + 2 * i], (FILTER_NUM, 1, fs, EMBEDDING_DIM), jnp.float32)
        conv_w.append(jnp.transpose(w_oihw[:, 0, :, :], (1, 2, 0)))   # (fs, D, F)
        conv_b.append(0.1 * jax.random.normal(
            ks[2 + 2 * i], (1, FILTER_NUM), jnp.float32))             # (1, F)

    fc_in = len(FILTER_SIZES) * FILTER_NUM
    fc_w = 0.1 * jax.random.normal(ks[-2], (fc_in, OUTPUT_DIM), jnp.float32)
    fc_b = 0.1 * jax.random.normal(ks[-1], (1, OUTPUT_DIM), jnp.float32)

    return {'embedding': emb_tbl, 'conv_w': conv_w, 'conv_b': conv_b,
            'fc_w': fc_w, 'fc_b': fc_b}


# --------------------------------- main --------------------------------------
if __name__ == "__main__":
    key = jax.random.PRNGKey(0)
    pkey, tkey = jax.random.split(key)
    params = init_params(pkey)
    packed = pack_params(params, SEQ_LEN)

    text = jax.random.randint(tkey, (BATCH, SEQ_LEN), 0, VOCAB_SIZE, dtype=jnp.int32)

    logits = textcnn_forward(text, *packed)
    jax.block_until_ready(logits)

    # sanity: pure-JAX reference of the same math (unpacked params)
    emb = params['embedding'][text]                                   # (B, L, D)
    pooled = []
    for fs, w, b in zip(FILTER_SIZES, params['conv_w'], params['conv_b']):
        l_out = SEQ_LEN - fs + 1
        acc = jnp.zeros((BATCH, l_out, FILTER_NUM), jnp.float32)
        for k in range(fs):
            acc = acc + jnp.einsum('bld,df->blf', emb[:, k:k + l_out, :], w[k])
        pooled.append(jnp.max(jnp.maximum(acc + b, 0.0), axis=1))
    ref = jnp.concatenate(pooled, axis=-1) @ params['fc_w'] + params['fc_b']

    assert logits.shape == (BATCH, OUTPUT_DIM)
    assert jnp.allclose(logits, ref, atol=1e-4, rtol=1e-4)

    print("KERNEL_OK")
</pallas_src>

<mosaic_0001>
module attributes {stable_mosaic.version = 11 : i64} {
  func.func @textcnn_kernel(%arg0: memref<32x1xi32, #tpu.memory_space<vmem>>, %arg1: memref<50x32xf32, #tpu.memory_space<vmem>>, %arg2: memref<160x24xf32, #tpu.memory_space<vmem>>, %arg3: memref<2x24xf32, #tpu.memory_space<vmem>>, %arg4: memref<25x128xf32, #tpu.memory_space<vmem>>, %arg5: memref<2x128xf32, #tpu.memory_space<vmem>>) attributes {dimension_semantics = [], scalar_prefetch = 0 : i64, scratch_operands = 0 : i64, tpu.core_type = #tpu.core_type<tc>} {
    %c0 = arith.constant 0 : index
    %c0_0 = arith.constant 0 : index
    %0 = vector.load %arg0[%c0, %c0_0] : memref<32x1xi32, #tpu.memory_space<vmem>>, vector<32x1xi32>
    %1 = tpu.iota {dimensions = array<i32: 1>} : vector<32x50xi32>
    %2 = vector.broadcast %0 : vector<32x1xi32> to vector<32x50xi32>
    %3 = arith.cmpi eq, %1, %2 : vector<32x50xi32>
    %4 = arith.extui %3 : vector<32x50xi1> to vector<32x50xi32>
    %5 = arith.sitofp %4 : vector<32x50xi32> to vector<32x50xf32>
    %c0_1 = arith.constant 0 : index
    %c0_2 = arith.constant 0 : index
    %6 = vector.load %arg1[%c0_1, %c0_2] : memref<50x32xf32, #tpu.memory_space<vmem>>, vector<50x32xf32>
    %cst = arith.constant dense<0.000000e+00> : vector<32x32xf32>
    %7 = tpu.matmul %5, %6, %cst {dimension_numbers = #tpu.dot_dimension_numbers<[1], [0], [0], [1], [0, 0, 1, 1], [], []>} : vector<32x50xf32>, vector<50x32xf32>, vector<32x32xf32> -> vector<32x32xf32>
    %cst_3 = arith.constant 0.000000e+00 : f32
    %8 = vector.broadcast %cst_3 : f32 to vector<8x32xf32>
    %9 = tpu.concatenate %7, %8 in 0 : vector<32x32xf32>, vector<8x32xf32> -> vector<40x32xf32>
    %10 = vector.extract_strided_slice %9 {offsets = [0, 0], sizes = [32, 32], strides = [1, 1]} : vector<40x32xf32> to vector<32x32xf32>
    %11 = vector.extract_strided_slice %9 {offsets = [1, 0], sizes = [32, 32], strides = [1, 1]} : vector<40x32xf32> to vector<32x32xf32>
    %12 = vector.extract_strided_slice %9 {offsets = [2, 0], sizes = [32, 32], strides = [1, 1]} : vector<40x32xf32> to vector<32x32xf32>
    %13 = vector.extract_strided_slice %9 {offsets = [3, 0], sizes = [32, 32], strides = [1, 1]} : vector<40x32xf32> to vector<32x32xf32>
    %14 = vector.extract_strided_slice %9 {offsets = [4, 0], sizes = [32, 32], strides = [1, 1]} : vector<40x32xf32> to vector<32x32xf32>
    %15 = tpu.concatenate %10, %11, %12, %13, %14 in 1 : vector<32x32xf32>, vector<32x32xf32>, vector<32x32xf32>, vector<32x32xf32>, vector<32x32xf32> -> vector<32x160xf32>
    %c0_4 = arith.constant 0 : index
    %c0_5 = arith.constant 0 : index
    %16 = vector.load %arg2[%c0_4, %c0_5] : memref<160x24xf32, #tpu.memory_space<vmem>>, vector<160x24xf32>
    %cst_6 = arith.constant dense<0.000000e+00> : vector<32x24xf32>
    %17 = tpu.matmul %15, %16, %cst_6 {dimension_numbers = #tpu.dot_dimension_numbers<[1], [0], [0], [1], [0, 0, 1, 1], [], []>} : vector<32x160xf32>, vector<160x24xf32>, vector<32x24xf32> -> vector<32x24xf32>
    %c0_7 = arith.constant 0 : index
    %c0_8 = arith.constant 0 : index
    %18 = vector.load %arg3[%c0_7, %c0_8] : memref<2x24xf32, #tpu.memory_space<vmem>>, vector<1x24xf32>
    %19 = vector.broadcast %18 : vector<1x24xf32> to vector<32x24xf32>
    %20 = arith.addf %17, %19 : vector<32x24xf32>
    %cst_9 = arith.constant 0.000000e+00 : f32
    %21 = vector.broadcast %cst_9 : f32 to vector<32x24xf32>
    %22 = arith.maximumf %20, %21 : vector<32x24xf32>
    %23 = vector.shape_cast %22 : vector<32x24xf32> to vector<2x16x24xf32>
    %24 = tpu.iota {dimensions = array<i32: 1>} : vector<2x16x24xi32>
    %25 = arith.sitofp %24 : vector<2x16x24xi32> to vector<2x16x24xf32>
    %c1 = arith.constant 1 : index
    %c0_10 = arith.constant 0 : index
    %26 = vector.load %arg3[%c1, %c0_10] : memref<2x24xf32, #tpu.memory_space<vmem>>, vector<1x24xf32>
    %27 = vector.shape_cast %26 : vector<1x24xf32> to vector<1x1x24xf32>
    %28 = vector.broadcast %27 : vector<1x1x24xf32> to vector<2x16x24xf32>
    %29 = arith.cmpf ole, %25, %28 : vector<2x16x24xf32>
    %cst_11 = arith.constant 0.000000e+00 : f32
    %30 = vector.broadcast %cst_11 : f32 to vector<2x16x24xf32>
    %31 = arith.select %29, %23, %30 : vector<2x16x24xi1>, vector<2x16x24xf32>
    %cst_12 = arith.constant dense<0xFF800000> : vector<2x24xf32>
    %32 = vector.multi_reduction <maximumf>, %31, %cst_12 [1] : vector<2x16x24xf32> to vector<2x24xf32>
    %c0_13 = arith.constant 0 : index
    %c0_14 = arith.constant 0 : index
    %33 = vector.load %arg4[%c0_13, %c0_14] : memref<25x128xf32, #tpu.memory_space<vmem>>, vector<24x128xf32>
    %cst_15 = arith.constant dense<0.000000e+00> : vector<2x128xf32>
    %34 = tpu.matmul %32, %33, %cst_15 {dimension_numbers = #tpu.dot_dimension_numbers<[1], [0], [0], [1], [0, 0, 1, 1], [], []>} : vector<2x24xf32>, vector<24x128xf32>, vector<2x128xf32> -> vector<2x128xf32>
    %c24 = arith.constant 24 : index
    %c0_16 = arith.constant 0 : index
    %35 = vector.load %arg4[%c24, %c0_16] : memref<25x128xf32, #tpu.memory_space<vmem>>, vector<1x128xf32>
    %36 = vector.broadcast %35 : vector<1x128xf32> to vector<2x128xf32>
    %37 = arith.addf %34, %36 : vector<2x128xf32>
    %c0_17 = arith.constant 0 : index
    %c0_18 = arith.constant 0 : index
    %38 = vector.load %arg5[%c0_17, %c0_18] : memref<2x128xf32, #tpu.memory_space<vmem>>, vector<2x128xf32>
    tpu.vector_store %arg5[%c0_17, %c0_18], %37 {strides = array<i32>} : memref<2x128xf32, #tpu.memory_space<vmem>>, vector<2x128xf32>,
    return
  }
}

</mosaic_0001>

<llo_original>
// kernel: textcnn_forward.1
$region0: #{textcnn_forward.1}
  #allocation0 [shape = 'u32[]', space=smem, size = 0x4, offset = 0x4, fixed_abs, tag = 'smem constant byte address 0x4 - core index']
  #allocation1 [shape = 'u32[144,128]{1,0:T(1,128)}', space=vmem, size = 0x12000, scoped, tag = 'internal scratch']
  %s0 = inlined_call_operand.vmem [shape: s32[32,1], index: 0, kind: input, shape index: {}]
  %s1 = inlined_call_operand.vmem [shape: f32[50,32], index: 1, kind: input, shape index: {}]
  %s2 = inlined_call_operand.vmem [shape: f32[160,24], index: 2, kind: input, shape index: {}]
  %s3 = inlined_call_operand.vmem [shape: f32[2,24], index: 3, kind: input, shape index: {}]
  %s4 = inlined_call_operand.vmem [shape: f32[25,128], index: 4, kind: input, shape index: {}]
  %s5 = inlined_call_operand.hbm [shape: f32[2,128], index: 5, kind: output, shape index: {}]
  %s6 = sld [smem:[#allocation0]]
  $region30: #{textcnn_forward.1} parent=0
    _
  %s8 = ssub.s32 1, %s6
  %s9 = scalar_select 0, %s8, %s6
  $region1: #{textcnn_forward.1} parent=0
    #allocation2 [shape = 'u8[1024]{0}', space=vmem, size = 0x400, scoped, tag = 'output window, operand 0, single buffered']
    #allocation3 [shape = 's32[1]{0}', space=sflag, size = 0x4, scoped, tag = 'scoped memory for textcnn_forward.1']
    %10 = vsyncpa [#allocation3], 0
    // Predicated region
    $region2: #{textcnn_forward.1} parent=1 // pred_check
      _
    $region3: #{textcnn_forward.1} parent=1 // pred_check_branch
      %12 = sbr.rel (0) target = $region5
    $region4: #{textcnn_forward.1} parent=1 // pred_region
      _
    $region5: #{textcnn_forward.1} parent=1 // pred_fallthru
      _
    // Predicated region
    $region6: #{textcnn_forward.1} parent=1 // pred_check
      _
    $region7: #{textcnn_forward.1} parent=1 // pred_check_branch
      %14 = sbr.rel (0) target = $region9
    $region8: #{textcnn_forward.1} parent=1 // pred_region
      _
    $region9: #{textcnn_forward.1} parent=1 // pred_fallthru
      _
    // Predicated region
    $region10: #{textcnn_forward.1} parent=1 // pred_check
      _
    $region11: #{textcnn_forward.1} parent=1 // pred_check_branch
      %16 = sbr.rel (0) target = $region13
    $region12: #{textcnn_forward.1} parent=1 // pred_region
      _
    $region13: #{textcnn_forward.1} parent=1 // pred_fallthru
      _
    // Predicated region
    $region14: #{textcnn_forward.1} parent=1 // pred_check
      _
    $region15: #{textcnn_forward.1} parent=1 // pred_check_branch
      %18 = sbr.rel (0) target = $region17
    $region16: #{textcnn_forward.1} parent=1 // pred_region
      _
    $region17: #{textcnn_forward.1} parent=1 // pred_fallthru
      _
    // Predicated region
    $region18: #{textcnn_forward.1} parent=1 // pred_check
      _
    $region19: #{textcnn_forward.1} parent=1 // pred_check_branch
      %20 = sbr.rel (0) target = $region21
    $region20: #{textcnn_forward.1} parent=1 // pred_region
      _
    $region21: #{textcnn_forward.1} parent=1 // pred_fallthru
      _
    %v21 = vld [vmem:[%s0] sm:$0xff]
    %v22 = vld [vmem:[%s0 + $0x8] sm:$0xff]
    %v23 = vld [vmem:[%s0 + $0x10] sm:$0xff]
    %v24 = vld [vmem:[%s0 + $0x18] sm:$0xff]
    %v25 = vlaneseq
    %v26 = vand.u32 %v25, 127
    %27 = vset.pattern.permute.xlu0 0
    %28 = vperm.xlu0 %27, %v21
    %v29 = vpop.permute.xlu0 %28
    %30 = vset.pattern.permute.xlu0 0
    %31 = vperm.xlu0 %30, %v22
    %v32 = vpop.permute.xlu0 %31
    %33 = vset.pattern.permute.xlu0 0
    %34 = vperm.xlu0 %33, %v23
    %v35 = vpop.permute.xlu0 %34
    %36 = vset.pattern.permute.xlu0 0
    %37 = vperm.xlu0 %36, %v24
    %v38 = vpop.permute.xlu0 %37
    %vm39 = vcmp.eq.s32.totalorder %v26, %v29
    %vm40 = vcmp.eq.s32.totalorder %v26, %v32
    %vm41 = vcmp.eq.s32.totalorder %v26, %v35
    %vm42 = vcmp.eq.s32.totalorder %v26, %v38
    %v43 = vsel %vm39, 1, 0
    %v44 = vsel %vm40, 1, 0
    %v45 = vsel %vm41, 1, 0
    %v46 = vsel %vm42, 1, 0
    %v47 = vcvt.s32.f32 %v43
    %v48 = vcvt.s32.f32 %v44
    %v49 = vcvt.s32.f32 %v45
    %v50 = vcvt.s32.f32 %v46
    %v51 = vld [vmem:[%s1] sm:$0xff]
    %v52 = vld [vmem:[%s1 + $0x8] sm:$0xff]
    %v53 = vld [vmem:[%s1 + $0x10] sm:$0xff]
    %v54 = vld [vmem:[%s1 + $0x18] sm:$0xff]
    %v55 = vld [vmem:[%s1 + $0x20] sm:$0xff]
    %v56 = vld [vmem:[%s1 + $0x28] sm:$0xff]
    %v57 = vld [vmem:[%s1 + $0x30] sm:$0x3]
    %vm58 = vcmask 408576
    %v60 = vsel %vm58, %v47, 0
    %v63 = vsel %vm58, %v48, 0
    %v66 = vsel %vm58, %v49, 0
    %v69 = vsel %vm58, %v50, 0
    %vm71 = vcmask 1041408
    %v73 = vsel %vm71, %v57, 0
    %75 = vmatprep.subr.mxu0 0.0
    %76 = vmatpush1.msra.mxu0 %v51
    %77 = vmatprep.subr.mxu0 0.0
    %78 = vmatpush1.msra.mxu0 %v52
    %79 = vmatprep.subr.mxu0 0.0
    %80 = vmatpush1.msra.mxu0 %v53
    %81 = vmatprep.subr.mxu0 0.0
    %82 = vmatpush1.msra.mxu0 %v54
    %83 = vmatprep.subr.mxu0 0.0
    %84 = vmatpush1.msra.mxu0 %v55
    %85 = vmatprep.subr.mxu0 0.0
    %86 = vmatpush1.msra.mxu0 %v56
    %87 = vmatprep.subr.mxu0 0.0
    %88 = vmatpush1.msra.mxu0 %v73
    %89 = vmatprep.subr.mxu0 0.0
    %90 = vmatpush1.msra.mxu0 0.0
    %91 = vmatprep.subr.mxu0 0.0
    %92 = vmatpush1.msra.mxu0 0.0
    %93 = vmatprep.subr.mxu0 0.0
    %94 = vmatpush1.msra.mxu0 0.0
    %95 = vmatprep.subr.mxu0 0.0
    %96 = vmatpush1.msra.mxu0 0.0
    %97 = vmatprep.subr.mxu0 0.0
    %98 = vmatpush1.msra.mxu0 0.0
    %99 = vmatprep.subr.mxu0 0.0
    %100 = vmatpush1.msra.mxu0 0.0
    %101 = vmatprep.subr.mxu0 0.0
    %102 = vmatpush1.msra.mxu0 0.0
    %103 = vmatprep.subr.mxu0 0.0
    %104 = vmatpush1.msra.mxu0 0.0
    %105 = vmatprep.subr.mxu0 0.0
    %106 = vmatpush1.msra.mxu0 0.0
    %107 = vmatprep.subr.mxu0 0.0
    %108 = vmatpush1.msra.mxu0 0.0
    %109 = vmatprep.subr.mxu0 0.0
    %110 = vmatpush1.msra.mxu0 0.0
    %111 = vmatprep.subr.mxu0 0.0
    %112 = vmatpush1.msra.mxu0 0.0
    %113 = vmatprep.subr.mxu0 0.0
    %114 = vmatpush1.msra.mxu0 0.0
    %115 = vmatprep.subr.mxu0 0.0
    %116 = vmatpush1.msra.mxu0 0.0
    %117 = vmatprep.subr.mxu0 0.0
    %118 = vmatpush1.msra.mxu0 0.0
    %119 = vmatprep.subr.mxu0 0.0
    %120 = vmatpush1.msra.mxu0 0.0
    %121 = vmatprep.subr.mxu0 0.0
    %122 = vmatpush1.msra.mxu0 0.0
    %123 = vmatprep.subr.mxu0 0.0
    %124 = vmatpush1.msra.mxu0 0.0
    %125 = vmatprep.subr.mxu0 0.0
    %126 = vmatpush1.msra.mxu0 0.0
    %127 = vmatprep.subr.mxu0 0.0
    %128 = vmatpush1.msra.mxu0 0.0
    %129 = vmatprep.subr.mxu0 0.0
    %130 = vmatpush1.msra.mxu0 0.0
    %131 = vmatprep.subr.mxu0 0.0
    %132 = vmatpush1.msra.mxu0 0.0
    %133 = vmatprep.subr.mxu0 0.0
    %134 = vmatpush1.msra.mxu0 0.0
    %135 = vmatprep.subr.mxu0 0.0
    %136 = vmatpush1.msra.mxu0 0.0
    %137 = vmatprep.subr.mxu0 0.0
    %138 = vmatpush1.msra.mxu0 0.0
    %139 = vmatprep.mubr.f32.mxu0 0.0
    %140 = vmatmul.mubr.f32.gmra.mrb[0].mxu0 %v60
    %v141 = vpop.f32.mrb[0].mxu0
    %v142 = vadd.f32 0.0, %v141
    %v143 = vpop.f32.mrb[0].mxu0
    %144 = vmatprep.mubr.f32.mxu0 0.0
    %145 = vmatmul.mubr.f32.gmra.mrb[0].mxu0 %v63
    %v146 = vpop.f32.mrb[0].mxu0
    %v147 = vadd.f32 0.0, %v146
    %v148 = vpop.f32.mrb[0].mxu0
    %149 = vmatprep.mubr.f32.mxu0 0.0
    %150 = vmatmul.mubr.f32.gmra.mrb[0].mxu0 %v66
    %v151 = vpop.f32.mrb[0].mxu0
    %v152 = vadd.f32 0.0, %v151
    %v153 = vpop.f32.mrb[0].mxu0
    %154 = vmatprep.mubr.f32.mxu0 0.0
    %155 = vmatmul.mubr.f32.gmra.mrb[0].mxu0 %v69
    %v156 = vpop.f32.mrb[0].mxu0
    %v157 = vadd.f32 0.0, %v156
    %v158 = vpop.f32.mrb[0].mxu0
    %159 = vdwg.mxu0
    %vm165 = vcmask 1046528
    %v166 = vrot.slane %v142, 1
    %v167 = vrot.slane %v147, 1
    %v168 = vsel %vm165, %v166, %v167
    %v169 = vrot.slane %v152, 1
    %v170 = vsel %vm165, %v167, %v169
    %v171 = vrot.slane %v157, 1
    %v172 = vsel %vm165, %v169, %v171
    %v173 = vrot.slane 0.0, 1
    %v174 = vsel %vm165, %v171, %v173
    %175 = vrot.lane.b32.xlu0 %v168, 32
    %v176 = vpop.permute.xlu0 %175
    %177 = vrot.lane.b32.xlu0 %v170, 32
    %v178 = vpop.permute.xlu0 %177
    %179 = vrot.lane.b32.xlu0 %v172, 32
    %v180 = vpop.permute.xlu0 %179
    %181 = vrot.lane.b32.xlu0 %v174, 32
    %v182 = vpop.permute.xlu0 %181
    %vm187 = vcmask 1045504
    %v188 = vrot.slane %v142, 2
    %v189 = vrot.slane %v147, 2
    %v190 = vsel %vm187, %v188, %v189
    %v191 = vrot.slane %v152, 2
    %v192 = vsel %vm187, %v189, %v191
    %v193 = vrot.slane %v157, 2
    %v194 = vsel %vm187, %v191, %v193
    %v195 = vrot.slane 0.0, 2
    %v196 = vsel %vm187, %v193, %v195
    %197 = vrot.lane.b32.xlu0 %v190, 64
    %v198 = vpop.permute.xlu0 %197
    %199 = vrot.lane.b32.xlu0 %v192, 64
    %v200 = vpop.permute.xlu0 %199
    %201 = vrot.lane.b32.xlu0 %v194, 64
    %v202 = vpop.permute.xlu0 %201
    %203 = vrot.lane.b32.xlu0 %v196, 64
    %v204 = vpop.permute.xlu0 %203
    %vm209 = vcmask 1044480
    %v210 = vrot.slane %v142, 3
    %v211 = vrot.slane %v147, 3
    %v212 = vsel %vm209, %v210, %v211
    %v213 = vrot.slane %v152, 3
    %v214 = vsel %vm209, %v211, %v213
    %v215 = vrot.slane %v157, 3
    %v216 = vsel %vm209, %v213, %v215
    %v217 = vrot.slane 0.0, 3
    %v218 = vsel %vm209, %v215, %v217
    %219 = vrot.lane.b32.xlu0 %v212, 96
    %v220 = vpop.permute.xlu0 %219
    %221 = vrot.lane.b32.xlu0 %v214, 96
    %v222 = vpop.permute.xlu0 %221
    %223 = vrot.lane.b32.xlu0 %v216, 96
    %v224 = vpop.permute.xlu0 %223
    %225 = vrot.lane.b32.xlu0 %v218, 96
    %v226 = vpop.permute.xlu0 %225
    %vm231 = vcmask 1043456
    %v232 = vrot.slane %v142, 4
    %v233 = vrot.slane %v147, 4
    %v234 = vsel %vm231, %v232, %v233
    %v235 = vrot.slane %v152, 4
    %v236 = vsel %vm231, %v233, %v235
    %v237 = vrot.slane %v157, 4
    %v238 = vsel %vm231, %v235, %v237
    %v239 = vrot.slane 0.0, 4
    %v240 = vsel %vm231, %v237, %v239
    %vm241 = vcmask 261120
    %v242 = vsel %vm241, %v142, %v176
    %v243 = vsel %vm241, %v147, %v178
    %v244 = vsel %vm241, %v152, %v180
    %v245 = vsel %vm241, %v157, %v182
    %vm246 = vcmask 523264
    %v247 = vsel %vm246, %v242, %v198
    %v248 = vsel %vm246, %v243, %v200
    %v249 = vsel %vm246, %v244, %v202
    %v250 = vsel %vm246, %v245, %v204
    %vm251 = vcmask 785408
    %v252 = vsel %vm251, %v247, %v220
    %v253 = vsel %vm251, %v248, %v222
    %v254 = vsel %vm251, %v249, %v224
    %v255 = vsel %vm251, %v250, %v226
    %v256 = vld [vmem:[%s2] sm:$0xff]
    %v257 = vld [vmem:[%s2 + $0x8] sm:$0xff]
    %v258 = vld [vmem:[%s2 + $0x10] sm:$0xff]
    %v259 = vld [vmem:[%s2 + $0x18] sm:$0xff]
    %v260 = vld [vmem:[%s2 + $0x20] sm:$0xff]
    %v261 = vld [vmem:[%s2 + $0x28] sm:$0xff]
    %v262 = vld [vmem:[%s2 + $0x30] sm:$0xff]
    %v263 = vld [vmem:[%s2 + $0x38] sm:$0xff]
    %v264 = vld [vmem:[%s2 + $0x40] sm:$0xff]
    %v265 = vld [vmem:[%s2 + $0x48] sm:$0xff]
    %v266 = vld [vmem:[%s2 + $0x50] sm:$0xff]
    %v267 = vld [vmem:[%s2 + $0x58] sm:$0xff]
    %v268 = vld [vmem:[%s2 + $0x60] sm:$0xff]
    %v269 = vld [vmem:[%s2 + $0x68] sm:$0xff]
    %v270 = vld [vmem:[%s2 + $0x70] sm:$0xff]
    %v271 = vld [vmem:[%s2 + $0x78] sm:$0xff]
    %v272 = vld [vmem:[%s2 + $0x80] sm:$0xff]
    %v273 = vld [vmem:[%s2 + $0x88] sm:$0xff]
    %v274 = vld [vmem:[%s2 + $0x90] sm:$0xff]
    %v275 = vld [vmem:[%s2 + $0x98] sm:$0xff]
    %v276 = vld [vmem:[%s3] sm:$0x1]
    %v277 = vlaneseq
    %v278 = vshrl.u32 %v277, 7
    %v279 = vsub.s32 0, %v278
    %v280 = vrot.slane %v276, %v279
    %v281 = vsel %vm241, %v234, 0
    %v283 = vsel %vm241, %v236, 0
    %v285 = vsel %vm241, %v238, 0
    %v287 = vsel %vm241, %v240, 0
    %289 = vmatprep.subr.mxu0 0.0
    %290 = vmatpush1.msra.mxu0 %v256
    %291 = vmatprep.subr.mxu0 0.0
    %292 = vmatpush1.msra.mxu0 %v257
    %293 = vmatprep.subr.mxu0 0.0
    %294 = vmatpush1.msra.mxu0 %v258
    %295 = vmatprep.subr.mxu0 0.0
    %296 = vmatpush1.msra.mxu0 %v259
    %297 = vmatprep.subr.mxu0 0.0
    %298 = vmatpush1.msra.mxu0 %v260
    %299 = vmatprep.subr.mxu0 0.0
    %300 = vmatpush1.msra.mxu0 %v261
    %301 = vmatprep.subr.mxu0 0.0
    %302 = vmatpush1.msra.mxu0 %v262
    %303 = vmatprep.subr.mxu0 0.0
    %304 = vmatpush1.msra.mxu0 %v263
    %305 = vmatprep.subr.mxu0 0.0
    %306 = vmatpush1.msra.mxu0 %v264
    %307 = vmatprep.subr.mxu0 0.0
    %308 = vmatpush1.msra.mxu0 %v265
    %309 = vmatprep.subr.mxu0 0.0
    %310 = vmatpush1.msra.mxu0 %v266
    %311 = vmatprep.subr.mxu0 0.0
    %312 = vmatpush1.msra.mxu0 %v267
    %313 = vmatprep.subr.mxu0 0.0
    %314 = vmatpush1.msra.mxu0 %v268
    %315 = vmatprep.subr.mxu0 0.0
    %316 = vmatpush1.msra.mxu0 %v269
    %317 = vmatprep.subr.mxu0 0.0
    %318 = vmatpush1.msra.mxu0 %v270
    %319 = vmatprep.subr.mxu0 0.0
    %320 = vmatpush1.msra.mxu0 %v271
    %321 = vmatprep.subr.mxu0 0.0
    %322 = vmatpush1.msra.mxu0 %v272
    %323 = vmatprep.subr.mxu0 0.0
    %324 = vmatpush1.msra.mxu0 %v273
    %325 = vmatprep.subr.mxu0 0.0
    %326 = vmatpush1.msra.mxu0 %v274
    %327 = vmatprep.subr.mxu0 0.0
    %328 = vmatpush1.msra.mxu0 %v275
    %329 = vmatprep.subr.mxu0 0.0
    %330 = vmatpush1.msra.mxu0 0.0
    %331 = vmatprep.subr.mxu0 0.0
    %332 = vmatpush1.msra.mxu0 0.0
    %333 = vmatprep.subr.mxu0 0.0
    %334 = vmatpush1.msra.mxu0 0.0
    %335 = vmatprep.subr.mxu0 0.0
    %336 = vmatpush1.msra.mxu0 0.0
    %337 = vmatprep.subr.mxu0 0.0
    %338 = vmatpush1.msra.mxu0 0.0
    %339 = vmatprep.subr.mxu0 0.0
    %340 = vmatpush1.msra.mxu0 0.0
    %341 = vmatprep.subr.mxu0 0.0
    %342 = vmatpush1.msra.mxu0 0.0
    %343 = vmatprep.subr.mxu0 0.0
    %344 = vmatpush1.msra.mxu0 0.0
    %345 = vmatprep.subr.mxu0 0.0
    %346 = vmatpush1.msra.mxu0 0.0
    %347 = vmatprep.subr.mxu0 0.0
    %348 = vmatpush1.msra.mxu0 0.0
    %349 = vmatprep.subr.mxu0 0.0
    %350 = vmatpush1.msra.mxu0 0.0
    %351 = vmatprep.subr.mxu0 0.0
    %352 = vmatpush1.msra.mxu0 0.0
    %353 = vmatprep.mubr.f32.mxu0 %v281
    %354 = vmatmul.mubr.f32.gmra.mrb[0].mxu0 %v252
    %v355 = vpop.f32.mrb[0].mxu0
    %v356 = vadd.f32 %v280, %v355
    %v357 = vpop.f32.mrb[0].mxu0
    %358 = vmatprep.mubr.f32.mxu0 %v283
    %359 = vmatmul.mubr.f32.gmra.mrb[0].mxu0 %v253
    %v360 = vpop.f32.mrb[0].mxu0
    %v361 = vadd.f32 %v280, %v360
    %v362 = vpop.f32.mrb[0].mxu0
    %363 = vmatprep.mubr.f32.mxu0 %v285
    %364 = vmatmul.mubr.f32.gmra.mrb[0].mxu0 %v254
    %v365 = vpop.f32.mrb[0].mxu0
    %v366 = vadd.f32 %v280, %v365
    %v367 = vpop.f32.mrb[0].mxu0
    %368 = vmatprep.mubr.f32.mxu0 %v287
    %369 = vmatmul.mubr.f32.gmra.mrb[0].mxu0 %v255
    %v370 = vpop.f32.mrb[0].mxu0
    %v371 = vadd.f32 %v280, %v370
    %v372 = vpop.f32.mrb[0].mxu0
    %373 = vdwg.mxu0
    %v374 = vmax.f32 %v356, 0.0
    %v375 = vmax.f32 %v361, 0.0
    %v376 = vmax.f32 %v366, 0.0
    %v377 = vmax.f32 %v371, 0.0
    %v378 = vlaneseq
    %v379 = vshrl.u32 %v378, 7
    %v380 = vadd.s32 %v379, 8
    %v381 = vcvt.s32.f32 %v379
    %v382 = vcvt.s32.f32 %v380
    %v383 = vld [vmem:[%s3 + $0x1] sm:$0x1]
    %v384 = vlaneseq
    %v385 = vshrl.u32 %v384, 7
    %v386 = vsub.s32 0, %v385
    %v387 = vrot.slane %v383, %v386
    %vm388 = vcmp.le.f32.partialorder %v381, %v387
    %vm389 = vcmp.le.f32.partialorder %v382, %v387
    %v390 = vsel %vm388, %v374, 0.0
    %v391 = vsel %vm389, %v375, 0.0
    %v392 = vsel %vm388, %v376, 0.0
    %v393 = vsel %vm389, %v377, 0.0
    %vm394 = vcmask 195584
    %v395 = vsel %vm394, %v390, -inf
    %v396 = vsel %vm394, %v391, -inf
    %v397 = vmax.f32 %v395, %v396
    %v398 = vrot.slane %v397, 4
    %v399 = vmax.f32 %v397, %v398
    %v400 = vrot.slane %v399, 2
    %v401 = vmax.f32 %v399, %v400
    %v402 = vrot.slane %v401, 1
    %v403 = vmax.f32 %v401, %v402
    %v404 = vsel %vm394, %v392, -inf
    %v405 = vsel %vm394, %v393, -inf
    %v406 = vmax.f32 %v404, %v405
    %v407 = vrot.slane %v406, 4
    %v408 = vmax.f32 %v406, %v407
    %v409 = vrot.slane %v408, 2
    %v410 = vmax.f32 %v408, %v409
    %v411 = vrot.slane %v410, 1
    %v412 = vmax.f32 %v410, %v411
    %v413 = vld [vmem:[%s4] sm:$0xff]
    %v414 = vld [vmem:[%s4 + $0x8] sm:$0xff]
    %v415 = vld [vmem:[%s4 + $0x10] sm:$0xff]
    %v416 = vld [vmem:[%s4 + $0x18] sm:$0x1]
    %v417 = vlaneseq
    %v418 = vshrl.u32 %v417, 7
    %v419 = vsub.s32 0, %v418
    %v420 = vrot.slane %v416, %v419
    %vm423 = vcmask 1041409
    %v424 = vsel %vm423, %v412, %v403
    %v425 = vsel %vm394, %v424, 0
    %427 = vmatprep.subr.mxu0 0.0
    %428 = vmatpush1.msra.mxu0 %v413
    %429 = vmatprep.subr.mxu0 0.0
    %430 = vmatpush1.msra.mxu0 %v414
    %431 = vmatprep.subr.mxu0 0.0
    %432 = vmatpush1.msra.mxu0 %v415
    %433 = vmatprep.subr.mxu0 0.0
    %434 = vmatpush1.msra.mxu0 0.0
    %435 = vmatprep.subr.mxu0 0.0
    %436 = vmatpush1.msra.mxu0 0.0
    %437 = vmatprep.subr.mxu0 0.0
    %438 = vmatpush1.msra.mxu0 0.0
    %439 = vmatprep.subr.mxu0 0.0
    %440 = vmatpush1.msra.mxu0 0.0
    %441 = vmatprep.subr.mxu0 0.0
    %442 = vmatpush1.msra.mxu0 0.0
    %443 = vmatprep.subr.mxu0 0.0
    %444 = vmatpush1.msra.mxu0 0.0
    %445 = vmatprep.subr.mxu0 0.0
    %446 = vmatpush1.msra.mxu0 0.0
    %447 = vmatprep.subr.mxu0 0.0
    %448 = vmatpush1.msra.mxu0 0.0
    %449 = vmatprep.subr.mxu0 0.0
    %450 = vmatpush1.msra.mxu0 0.0
    %451 = vmatprep.subr.mxu0 0.0
    %452 = vmatpush1.msra.mxu0 0.0
    %453 = vmatprep.subr.mxu0 0.0
    %454 = vmatpush1.msra.mxu0 0.0
    %455 = vmatprep.subr.mxu0 0.0
    %456 = vmatpush1.msra.mxu0 0.0
    %457 = vmatprep.subr.mxu0 0.0
    %458 = vmatpush1.msra.mxu0 0.0
    %459 = vmatprep.subr.mxu0 0.0
    %460 = vmatpush1.msra.mxu0 0.0
    %461 = vmatprep.subr.mxu0 0.0
    %462 = vmatpush1.msra.mxu0 0.0
    %463 = vmatprep.subr.mxu0 0.0
    %464 = vmatpush1.msra.mxu0 0.0
    %465 = vmatprep.subr.mxu0 0.0
    %466 = vmatpush1.msra.mxu0 0.0
    %467 = vmatprep.subr.mxu0 0.0
    %468 = vmatpush1.msra.mxu0 0.0
    %469 = vmatprep.subr.mxu0 0.0
    %470 = vmatpush1.msra.mxu0 0.0
    %471 = vmatprep.subr.mxu0 0.0
    %472 = vmatpush1.msra.mxu0 0.0
    %473 = vmatprep.subr.mxu0 0.0
    %474 = vmatpush1.msra.mxu0 0.0
    %475 = vmatprep.subr.mxu0 0.0
    %476 = vmatpush1.msra.mxu0 0.0
    %477 = vmatprep.subr.mxu0 0.0
    %478 = vmatpush1.msra.mxu0 0.0
    %479 = vmatprep.subr.mxu0 0.0
    %480 = vmatpush1.msra.mxu0 0.0
    %481 = vmatprep.subr.mxu0 0.0
    %482 = vmatpush1.msra.mxu0 0.0
    %483 = vmatprep.subr.mxu0 0.0
    %484 = vmatpush1.msra.mxu0 0.0
    %485 = vmatprep.subr.mxu0 0.0
    %486 = vmatpush1.msra.mxu0 0.0
    %487 = vmatprep.subr.mxu0 0.0
    %488 = vmatpush1.msra.mxu0 0.0
    %489 = vmatprep.subr.mxu0 0.0
    %490 = vmatpush1.msra.mxu0 0.0
    %491 = vmatprep.mubr.f32.mxu0 0.0
    %492 = vmatmul.mubr.f32.gmra.mrb[0].mxu0 %v425
    %v493 = vpop.f32.mrb[0].mxu0
    %v494 = vadd.f32 %v420, %v493
    %v495 = vpop.f32.mrb[0].mxu0
    %496 = vdwg.mxu0
    %497 = vst [vmem:[#allocation2] sm:$0x3] %v494
    // Predicated region
    $region22: #{textcnn_forward.1} parent=1 // pred_check
      _
    $region23: #{textcnn_forward.1} parent=1 // pred_check_branch
      %499 = sbr.rel (0) target = $region25
    $region24: #{textcnn_forward.1} parent=1 // pred_region
      %s501 = ssub.s32 32, 32
      %502 = vsyncadd [#allocation3], %s501
      %s504 = sshll.u32 [#allocation2], 4
      %s505 = int_to_ptr.vmem [resolvable:$true] %s504
      %507 = dma.vmem_to_hbm [thread:$0]  %s505, 32, %s5, [#allocation3]
    $region25: #{textcnn_forward.1} parent=1 // pred_fallthru
      _
    // Predicated region
    $region26: #{textcnn_forward.1} parent=1 // pred_check
      _
    $region27: #{textcnn_forward.1} parent=1 // pred_check_branch
      %509 = sbr.rel (0) target = $region29
    $region28: #{textcnn_forward.1} parent=1 // pred_region
      %510 = dma.done [#allocation3], 32
    $region29: #{textcnn_forward.1} parent=1 // pred_fallthru
      _
    %511 = vsyncpa [#allocation3], 1

</llo_original>
